<compile_context>
chip_gen: v7x
topology: tpu7x:2x2x1
jax: 0.10.0
libtpu: 0.0.40
codegen_flags: <defaults>
</compile_context>

<pallas_src>
import math

import jax
import jax.numpy as jnp
from jax.experimental import pallas as pl
from jax.experimental.pallas import tpu as pltpu

_LOG_2PI = math.log(2.0 * math.pi)

# Keep one input tile <= ~12 MiB (TB=1024 rows for f32 at N=3072, 2048 for bf16).
_TILE_BYTES_CAP = 12 * 1024 * 1024
# Force a multi-step grid (pipelining + v7x megacore) once the problem is big
# enough for DMA/compute overlap to matter.
_MIN_PIPELINE_BYTES = 1 << 20


def _sq_z_sum_kernel(x_ref, mu_ref, isig_ref, o_ref):
    # f32 path (VPU + XLU lane-reduce) — exact, HBM-bound on all chips.
    # x_ref:    (TB, N)  flattened data tile (native dtype; cast to f32 here)
    # mu_ref:   (1, N)   per-channel mean broadcast to a flat row   (resident)
    # isig_ref: (1, N)   per-channel 1/sigma broadcast to flat row  (resident)
    # o_ref:    (TB, 1)  -0.5 * sum(z^2) per row (constant offset added outside)
    x = x_ref[...].astype(jnp.float32)
    z = (x - mu_ref[...]) * isig_ref[...]
    o_ref[...] = -0.5 * jnp.sum(z * z, axis=-1, keepdims=True)


def _sq_z_dot_kernel(x_ref, mu_ref, wneg_ref, o_ref):
    # bf16 path: row reduction on the MXU.
    # x_ref:    (TB, N)   bf16 data tile
    # mu_ref:   (1, N)    bf16 per-channel mean row                  (resident)
    # wneg_ref: (N, 128)  bf16, every column = -0.5 / sigma^2        (resident)
    #                     (lane-padded so the matmul stays on tile-aligned
    #                      shapes; extra columns are free — MXU cost is
    #                      dominated by streaming the LHS rows)
    # o_ref:    (TB, 1)   f32 partial log-prob per row
    d = x_ref[...] - mu_ref[...]                    # bf16 VPU sub
    acc = jnp.dot(d * d, wneg_ref[...],             # bf16 MXU, f32 accumulate
                  preferred_element_type=jnp.float32)
    o_ref[...] = acc[:, :1]                         # all columns identical


def _pick_batch_tile(B, N, itemsize, tb):
    """Batch-tile size: biggest tile under the byte cap, but >=4 grid steps."""
    cap = _TILE_BYTES_CAP // max(1, N * itemsize)
    cap = max(8, (cap // 8) * 8)
    TB = min(B, cap if tb is None else tb)
    if B * N * itemsize > _MIN_PIPELINE_BYTES:
        # At least 4 grid steps: DMA of tile i+1 overlaps compute of tile i,
        # and v7x's 2 TensorCores both get work.
        TB = min(TB, max(8, (pl.cdiv(B, 4) // 8) * 8))
    if TB < B:
        TB = max(8, (TB // 8) * 8)   # sublane granularity when actually tiling
    return TB


def base_forward(data, mean, logv, condition=None, *, tb=None):
    """JAX/Pallas equivalent of Base.forward.

    data: (B, C, H, W) NCHW (f32 or bf16).
    mean, logv: (C, 1, 1) parameters.
    condition: unused (matches the PyTorch module).
    Returns: (B, 1) float32 = sum over C*H*W of Normal(mean, exp(logv)).log_prob(data).
    """
    B, C, H, W = data.shape
    N = C * H * W
    itemsize = data.dtype.itemsize

    # Flatten in the NATIVE dtype (no f32 upcast on the wire).
    x2d = data.reshape(B, N)

    # Tiny per-channel params; exp hoisted out of the kernel.
    mean_c = mean.reshape(C).astype(jnp.float32)
    logv_c = logv.reshape(C).astype(jnp.float32)

    # sum_n (-logv_c(n) - 0.5*log(2*pi)) folded into a single scalar offset.
    offset = -(H * W) * jnp.sum(logv_c) - 0.5 * N * _LOG_2PI

    TB = _pick_batch_tile(B, N, itemsize, tb)
    grid = (pl.cdiv(B, TB),)

    # Explicit scoped-VMEM budget: 2x input tile (double-buffer) + room for
    # in-kernel intermediates + slack; capped below v7x's 64 MiB physical.
    tile_bytes = TB * N * itemsize
    vmem_limit = int(min(max(32 << 20, 4 * tile_bytes + (8 << 20)), 56 << 20))

    compiler_params = pltpu.CompilerParams(
        dimension_semantics=("parallel",),
        vmem_limit_bytes=vmem_limit,
    )
    cost = pl.CostEstimate(
        flops=4 * B * N,
        transcendentals=0,
        bytes_accessed=B * N * itemsize + B * 4 + 2 * N * 4,
    )

    if data.dtype == jnp.bfloat16:
        # MXU row-reduce path: 2 bf16 VPU ops/element, no XLU lane reduce.
        mu_row = (
            jnp.broadcast_to(mean_c[:, None], (C, H * W))
            .reshape(1, N).astype(jnp.bfloat16)
        )
        wneg = -0.5 * jnp.exp(-2.0 * logv_c)                    # -0.5 / sigma^2
        wneg_mat = (
            jnp.broadcast_to(wneg[:, None], (C, H * W))
            .reshape(N, 1).astype(jnp.bfloat16)
        )
        wneg_mat = jnp.broadcast_to(wneg_mat, (N, 128))          # lane-padded
        out = pl.pallas_call(
            _sq_z_dot_kernel,
            out_shape=jax.ShapeDtypeStruct((B, 1), jnp.float32),
            grid=grid,
            in_specs=[
                pl.BlockSpec((TB, N), lambda i: (i, 0)),
                pl.BlockSpec((1, N), lambda i: (0, 0)),
                pl.BlockSpec((N, 128), lambda i: (0, 0)),
            ],
            out_specs=pl.BlockSpec((TB, 1), lambda i: (i, 0)),
            compiler_params=compiler_params,
            cost_estimate=cost,
        )(x2d, mu_row, wneg_mat)
    else:
        # Exact f32 path (HBM-bound; VPU has headroom at f32 stream rates).
        mu_row = jnp.broadcast_to(mean_c[:, None], (C, H * W)).reshape(1, N)
        isig_row = (
            jnp.broadcast_to(jnp.exp(-logv_c)[:, None], (C, H * W)).reshape(1, N)
        )
        out = pl.pallas_call(
            _sq_z_sum_kernel,
            out_shape=jax.ShapeDtypeStruct((B, 1), jnp.float32),
            grid=grid,
            in_specs=[
                pl.BlockSpec((TB, N), lambda i: (i, 0)),
                pl.BlockSpec((1, N), lambda i: (0, 0)),
                pl.BlockSpec((1, N), lambda i: (0, 0)),
            ],
            out_specs=pl.BlockSpec((TB, 1), lambda i: (i, 0)),
            compiler_params=compiler_params,
            cost_estimate=cost,
        )(x2d, mu_row, isig_row)

    return out + offset


def base_forward_ref(data, mean, logv):
    """Pure-JAX reference (mirrors torch.distributions.Normal.log_prob)."""
    sigma = jnp.exp(logv)                       # (C,1,1)
    x = data.astype(jnp.float32)
    log_p = (
        -((x - mean) ** 2) / (2.0 * sigma ** 2)
        - logv
        - 0.5 * _LOG_2PI
    )                                           # (B,C,H,W)
    B = data.shape[0]
    return log_p.reshape(B, -1).sum(axis=-1, keepdims=True)


if __name__ == "__main__":
    key = jax.random.PRNGKey(0)
    k_data, k_mean, k_logv, k2, k3, k4 = jax.random.split(key, 6)

    # Small shapes consistent with the module (channel dim = 3).
    B, C, H, W = 2, 3, 16, 16
    data = jax.random.normal(k_data, (B, C, H, W), dtype=jnp.float32)
    condition = jnp.zeros((B, 8), dtype=jnp.float32)  # unused, as in PyTorch

    # Parameters: nn.Parameter(torch.zeros(3,1,1)) in __init__; small non-zero
    # deterministic values so broadcast / log-prob paths are exercised.
    mean = 0.1 * jax.random.normal(k_mean, (C, 1, 1), dtype=jnp.float32)
    logv = 0.1 * jax.random.normal(k_logv, (C, 1, 1), dtype=jnp.float32)

    # 1) Tiny f32 batch (single full-array block).
    out = jax.block_until_ready(base_forward(data, mean, logv, condition))
    ref = base_forward_ref(data, mean, logv)
    assert out.shape == (B, 1), out.shape
    assert jnp.allclose(out, ref, rtol=1e-5, atol=1e-2), (out, ref)

    # 2) Explicitly tiled f32 path (grid=3).
    B2 = 24
    data2 = jax.random.normal(k2, (B2, C, H, W), dtype=jnp.float32)
    out2 = jax.block_until_ready(base_forward(data2, mean, logv, condition, tb=8))
    ref2 = base_forward_ref(data2, mean, logv)
    assert out2.shape == (B2, 1), out2.shape
    assert jnp.allclose(out2, ref2, rtol=1e-5, atol=1e-2), (out2, ref2)

    # 3) Auto tiling, > 1 MiB of data -> forced >=4-step pipelined grid.
    B3 = 384
    data3 = jax.random.normal(k3, (B3, C, H, W), dtype=jnp.float32)
    out3 = jax.block_until_ready(base_forward(data3, mean, logv, condition))
    ref3 = base_forward_ref(data3, mean, logv)
    assert out3.shape == (B3, 1), out3.shape
    assert jnp.allclose(out3, ref3, rtol=1e-5, atol=1e-2), (out3, ref3)

    # 4) bf16 input -> MXU row-reduce path (grid=2).  bf16 elementwise math
    # plus the bf16 MXU matmul give ~0.1-0.5% relative error on the quadratic
    # term, hence the looser tolerance.
    B4 = 16
    data4 = jax.random.normal(k4, (B4, C, H, W), dtype=jnp.float32).astype(jnp.bfloat16)
    out4 = jax.block_until_ready(base_forward(data4, mean, logv, condition, tb=8))
    ref4 = base_forward_ref(data4, mean, logv)
    assert out4.shape == (B4, 1), out4.shape
    assert jnp.allclose(out4, ref4, rtol=1e-2, atol=2.0), (out4, ref4)

    print("KERNEL_OK")
</pallas_src>

<mosaic_0001>
module attributes {stable_mosaic.version = 11 : i64} {
  func.func @_sq_z_sum_kernel(%arg0: i32, %arg1: memref<2x768xf32, #tpu.memory_space<vmem>>, %arg2: memref<1x768xf32, #tpu.memory_space<vmem>>, %arg3: memref<1x768xf32, #tpu.memory_space<vmem>>, %arg4: memref<2x1xf32, #tpu.memory_space<vmem>>) attributes {dimension_semantics = [#tpu.dimension_semantics<parallel>], iteration_bounds = array<i64: 1>, scalar_prefetch = 0 : i64, scratch_operands = 0 : i64, tpu.core_type = #tpu.core_type<tc>, window_params = [{transform_indices = @transform_0, window_bounds = array<i64: 2, 768>}, {pipeline_mode = #tpu.pipeline_mode<synchronous>, transform_indices = @transform_1, window_bounds = array<i64: 1, 768>}, {pipeline_mode = #tpu.pipeline_mode<synchronous>, transform_indices = @transform_2, window_bounds = array<i64: 1, 768>}, {transform_indices = @transform_3, window_bounds = array<i64: 2, 1>}]} {
    %c0 = arith.constant 0 : index
    %c0_0 = arith.constant 0 : index
    %0 = vector.load %arg1[%c0, %c0_0] : memref<2x768xf32, #tpu.memory_space<vmem>>, vector<2x768xf32>
    %c0_1 = arith.constant 0 : index
    %c0_2 = arith.constant 0 : index
    %1 = vector.load %arg2[%c0_1, %c0_2] : memref<1x768xf32, #tpu.memory_space<vmem>>, vector<1x768xf32>
    %2 = vector.broadcast %1 : vector<1x768xf32> to vector<2x768xf32>
    %3 = arith.subf %0, %2 : vector<2x768xf32>
    %c0_3 = arith.constant 0 : index
    %c0_4 = arith.constant 0 : index
    %4 = vector.load %arg3[%c0_3, %c0_4] : memref<1x768xf32, #tpu.memory_space<vmem>>, vector<1x768xf32>
    %5 = vector.broadcast %4 : vector<1x768xf32> to vector<2x768xf32>
    %6 = arith.mulf %3, %5 : vector<2x768xf32>
    %7 = arith.mulf %6, %6 : vector<2x768xf32>
    %cst = arith.constant dense<0.000000e+00> : vector<2xf32>
    %8 = vector.multi_reduction <add>, %7, %cst [1] : vector<2x768xf32> to vector<2xf32>
    %9 = vector.shape_cast %8 : vector<2xf32> to vector<2x1xf32>
    %cst_5 = arith.constant -5.000000e-01 : f32
    %10 = vector.broadcast %cst_5 : f32 to vector<2x1xf32>
    %11 = arith.mulf %10, %9 : vector<2x1xf32>
    %c0_6 = arith.constant 0 : index
    %c0_7 = arith.constant 0 : index
    %12 = vector.load %arg4[%c0_6, %c0_7] : memref<2x1xf32, #tpu.memory_space<vmem>>, vector<2x1xf32>
    tpu.vector_store %arg4[%c0_6, %c0_7], %11 {strides = array<i32>} : memref<2x1xf32, #tpu.memory_space<vmem>>, vector<2x1xf32>,
    return
  }
  func.func @transform_0(%arg0: i32) -> (i32, i32) {
    %c0_i32 = arith.constant 0 : i32
    %c0_i32_0 = arith.constant 0 : i32
    return %arg0, %c0_i32 : i32, i32
  }
  func.func @transform_1(%arg0: i32) -> (i32, i32) {
    %c0_i32 = arith.constant 0 : i32
    %c0_i32_0 = arith.constant 0 : i32
    %c0_i32_1 = arith.constant 0 : i32
    return %c0_i32, %c0_i32_0 : i32, i32
  }
  func.func @transform_2(%arg0: i32) -> (i32, i32) {
    %c0_i32 = arith.constant 0 : i32
    %c0_i32_0 = arith.constant 0 : i32
    %c0_i32_1 = arith.constant 0 : i32
    return %c0_i32, %c0_i32_0 : i32, i32
  }
  func.func @transform_3(%arg0: i32) -> (i32, i32) {
    %c0_i32 = arith.constant 0 : i32
    %c0_i32_0 = arith.constant 0 : i32
    return %arg0, %c0_i32 : i32, i32
  }
}

</mosaic_0001>

<llo_original>
// kernel: tpu_custom_call.1
$region0: #{tpu_custom_call.1}
  #allocation0 [shape = 'u32[]', space=smem, size = 0x4, offset = 0x4, fixed_abs, tag = 'smem constant byte address 0x4 - core index']
  #allocation1 [shape = 'u32[144,128]{1,0:T(1,128)}', space=vmem, size = 0x12000, scoped, tag = 'internal scratch']
  %s0 = inlined_call_operand.hbm [shape: f32[2,768], index: 0, kind: input, shape index: {}]
  %s1 = inlined_call_operand.hbm [shape: f32[1,768], index: 1, kind: input, shape index: {}]
  %s2 = inlined_call_operand.vmem [shape: f32[1,768], index: 2, kind: input, shape index: {}]
  %s3 = inlined_call_operand.vmem [shape: f32[2,1], index: 3, kind: output, shape index: {}]
  %s4 = sld [smem:[#allocation0]]
  $region30: #{tpu_custom_call.1} parent=0
    _
  %s6 = ssub.s32 1, %s4
  %s7 = scalar_select 0, %s6, %s4
  $region1: #{tpu_custom_call.1} parent=0
    #allocation2 [shape = 'u8[6144]{0}', space=vmem, size = 0x1800, scoped, tag = 'input window, operand 0, single buffered']
    #allocation3 [shape = 's32[1]{0}', space=sflag, size = 0x4, scoped, tag = 'scoped memory for tpu_custom_call.1']
    #allocation4 [shape = 'u8[3072]{0}', space=vmem, size = 0xc00, scoped, tag = 'input window, operand 1, single buffered']
    #allocation5 [shape = 's32[1]{0}', space=sflag, size = 0x4, scoped, tag = 'scoped memory for tpu_custom_call.1']
    %8 = vsyncpa [#allocation3], 0
    %9 = vsyncpa [#allocation5], 0
    // Predicated region
    $region2: #{tpu_custom_call.1} parent=1 // pred_check
      _
    $region3: #{tpu_custom_call.1} parent=1 // pred_check_branch
      %11 = sbr.rel (0) target = $region5
    $region4: #{tpu_custom_call.1} parent=1 // pred_region
      %s13 = ssub.s32 192, 192
      %14 = vsyncadd [#allocation3], %s13
      %s16 = sshll.u32 [#allocation2], 4
      %s17 = int_to_ptr.vmem [resolvable:$true] %s16
      %19 = dma.hbm_to_vmem [thread:$0]  %s0, 192, %s17, [#allocation3]
    $region5: #{tpu_custom_call.1} parent=1 // pred_fallthru
      _
    // Predicated region
    $region6: #{tpu_custom_call.1} parent=1 // pred_check
      _
    $region7: #{tpu_custom_call.1} parent=1 // pred_check_branch
      %21 = sbr.rel (0) target = $region9
    $region8: #{tpu_custom_call.1} parent=1 // pred_region
      %s23 = ssub.s32 96, 96
      %24 = vsyncadd [#allocation5], %s23
      %s26 = sshll.u32 [#allocation4], 4
      %s27 = int_to_ptr.vmem [resolvable:$true] %s26
      %29 = dma.hbm_to_vmem [thread:$0]  %s1, 96, %s27, [#allocation5]
    $region9: #{tpu_custom_call.1} parent=1 // pred_fallthru
      _
    // Predicated region
    $region10: #{tpu_custom_call.1} parent=1 // pred_check
      _
    $region11: #{tpu_custom_call.1} parent=1 // pred_check_branch
      %31 = sbr.rel (0) target = $region13
    $region12: #{tpu_custom_call.1} parent=1 // pred_region
      _
    $region13: #{tpu_custom_call.1} parent=1 // pred_fallthru
      _
    // Predicated region
    $region14: #{tpu_custom_call.1} parent=1 // pred_check
      _
    $region15: #{tpu_custom_call.1} parent=1 // pred_check_branch
      %33 = sbr.rel (0) target = $region17
    $region16: #{tpu_custom_call.1} parent=1 // pred_region
      %34 = dma.done [#allocation3], 192
    $region17: #{tpu_custom_call.1} parent=1 // pred_fallthru
      _
    // Predicated region
    $region18: #{tpu_custom_call.1} parent=1 // pred_check
      _
    $region19: #{tpu_custom_call.1} parent=1 // pred_check_branch
      %36 = sbr.rel (0) target = $region21
    $region20: #{tpu_custom_call.1} parent=1 // pred_region
      %37 = dma.done [#allocation5], 96
    $region21: #{tpu_custom_call.1} parent=1 // pred_fallthru
      _
    %v38 = vld [vmem:[#allocation2] sm:$0xff]
    %v39 = vld [vmem:[#allocation2 + $0x8] sm:$0xf]
    %v40 = vld [vmem:[#allocation4] sm:$0x3f]
    %v42 = vlaneseq
    %v43 = vshrl.u32 %v42, 7
    %v44 = vsub.s32 0, %v43
    %v45 = vrot.slane %v40, %v44
    %v46 = vlaneseq
    %v47 = vshrl.u32 %v46, 7
    %v48 = vsub.s32 1, %v47
    %v49 = vrot.slane %v40, %v48
    %v50 = vlaneseq
    %v51 = vshrl.u32 %v50, 7
    %v52 = vsub.s32 2, %v51
    %v53 = vrot.slane %v40, %v52
    %v54 = vlaneseq
    %v55 = vshrl.u32 %v54, 7
    %v56 = vsub.s32 3, %v55
    %v57 = vrot.slane %v40, %v56
    %v58 = vlaneseq
    %v59 = vshrl.u32 %v58, 7
    %v60 = vsub.s32 4, %v59
    %v61 = vrot.slane %v40, %v60
    %v62 = vlaneseq
    %v63 = vshrl.u32 %v62, 7
    %v64 = vsub.s32 5, %v63
    %v65 = vrot.slane %v40, %v64
    %v66 = vcombine.low %v45, %v49
    %v67 = vcombine.low %v53, %v57
    %v69 = vunpack.c.l.s4 1983009808
    %v70 = vunpack.c.0.s8 %v69
    %v71 = vlaneseq
    %v72 = vshrl.u32 %v71, 7
    %v73 = vsub.s32 %v70, %v72
    %v74 = vrot.slane %v66, %v73
    %v76 = vunpack.c.l.s4 1983009808
    %v77 = vunpack.c.0.s8 %v76
    %v78 = vlaneseq
    %v79 = vshrl.u32 %v78, 7
    %v80 = vsub.s32 %v77, %v79
    %v81 = vrot.slane %v67, %v80
    %v82 = vcombine.low %v74, %v81
    %v83 = vcombine.low %v61, %v65
    %v85 = vunpack.c.l.s4 1983009808
    %v86 = vunpack.c.0.s8 %v85
    %v87 = vlaneseq
    %v88 = vshrl.u32 %v87, 7
    %v89 = vsub.s32 %v86, %v88
    %v90 = vrot.slane %v83, %v89
    %v93 = vsub.f32 %v38, %v82
    %v94 = vsub.f32 %v39, %v90
    %v95 = vld [vmem:[%s2] sm:$0x3f]
    %v97 = vlaneseq
    %v98 = vshrl.u32 %v97, 7
    %v99 = vsub.s32 0, %v98
    %v100 = vrot.slane %v95, %v99
    %v101 = vlaneseq
    %v102 = vshrl.u32 %v101, 7
    %v103 = vsub.s32 1, %v102
    %v104 = vrot.slane %v95, %v103
    %v105 = vlaneseq
    %v106 = vshrl.u32 %v105, 7
    %v107 = vsub.s32 2, %v106
    %v108 = vrot.slane %v95, %v107
    %v109 = vlaneseq
    %v110 = vshrl.u32 %v109, 7
    %v111 = vsub.s32 3, %v110
    %v112 = vrot.slane %v95, %v111
    %v113 = vlaneseq
    %v114 = vshrl.u32 %v113, 7
    %v115 = vsub.s32 4, %v114
    %v116 = vrot.slane %v95, %v115
    %v117 = vlaneseq
    %v118 = vshrl.u32 %v117, 7
    %v119 = vsub.s32 5, %v118
    %v120 = vrot.slane %v95, %v119
    %v121 = vcombine.low %v100, %v104
    %v122 = vcombine.low %v108, %v112
    %v124 = vunpack.c.l.s4 1983009808
    %v125 = vunpack.c.0.s8 %v124
    %v126 = vlaneseq
    %v127 = vshrl.u32 %v126, 7
    %v128 = vsub.s32 %v125, %v127
    %v129 = vrot.slane %v121, %v128
    %v131 = vunpack.c.l.s4 1983009808
    %v132 = vunpack.c.0.s8 %v131
    %v133 = vlaneseq
    %v134 = vshrl.u32 %v133, 7
    %v135 = vsub.s32 %v132, %v134
    %v136 = vrot.slane %v122, %v135
    %v137 = vcombine.low %v129, %v136
    %v138 = vcombine.low %v116, %v120
    %v140 = vunpack.c.l.s4 1983009808
    %v141 = vunpack.c.0.s8 %v140
    %v142 = vlaneseq
    %v143 = vshrl.u32 %v142, 7
    %v144 = vsub.s32 %v141, %v143
    %v145 = vrot.slane %v138, %v144
    %v148 = vmul.f32 %v93, %v137
    %v149 = vmul.f32 %v94, %v145
    %v150 = vmul.f32 %v148, %v148
    %v151 = vmul.f32 %v149, %v149
    %v154 = vcombine.high %v150, %v150
    %v156 = vunpack.c.l.s4 1983009808
    %v157 = vunpack.c.0.s8 %v156
    %v158 = vlaneseq
    %v159 = vshrl.u32 %v158, 7
    %v160 = vsub.s32 %v157, %v159
    %v161 = vrot.slane %v150, %v160
    %v163 = vunpack.c.l.s4 1983009808
    %v164 = vunpack.c.0.s8 %v163
    %v165 = vlaneseq
    %v166 = vshrl.u32 %v165, 7
    %v167 = vsub.s32 %v164, %v166
    %v168 = vrot.slane %v154, %v167
    %v169 = vcombine.high %v161, %v161
    %v170 = vcombine.high %v168, %v168
    %v172 = vunpack.c.l.s4 1983009808
    %v173 = vunpack.c.0.s8 %v172
    %v174 = vlaneseq
    %v175 = vshrl.u32 %v174, 7
    %v176 = vsub.s32 %v173, %v175
    %v177 = vrot.slane %v151, %v176
    %v178 = vcombine.high %v177, %v177
    %vm185 = vcmask 1041408
    %v186 = vsel %vm185, %v161, 0.0
    %v187 = vsel %vm185, %v169, 0.0
    %v188 = vadd.f32 %v186, %v187
    %v189 = vsel %vm185, %v168, 0.0
    %v190 = vadd.f32 %v188, %v189
    %v191 = vsel %vm185, %v170, 0.0
    %v192 = vadd.f32 %v190, %v191
    %v193 = vsel %vm185, %v177, 0.0
    %v194 = vadd.f32 %v192, %v193
    %v195 = vsel %vm185, %v178, 0.0
    %v196 = vadd.f32 %v194, %v195
    %197 = vadd.xlane.f32.xlu0 %v196
    %v198 = vpop.xlane.xlu0 %197
    %v199 = vmul.f32 %v198, -0.5
    %vm200 = vcmask 1024
    %201 = vst.msk [vmem:[%s3] sm:$0x3] %vm200, %v199
    // Predicated region
    $region22: #{tpu_custom_call.1} parent=1 // pred_check
      _
    $region23: #{tpu_custom_call.1} parent=1 // pred_check_branch
      %203 = sbr.rel (0) target = $region25
    $region24: #{tpu_custom_call.1} parent=1 // pred_region
      _
    $region25: #{tpu_custom_call.1} parent=1 // pred_fallthru
      _
    // Predicated region
    $region26: #{tpu_custom_call.1} parent=1 // pred_check
      _
    $region27: #{tpu_custom_call.1} parent=1 // pred_check_branch
      %205 = sbr.rel (0) target = $region29
    $region28: #{tpu_custom_call.1} parent=1 // pred_region
      _
    $region29: #{tpu_custom_call.1} parent=1 // pred_fallthru
      _
    %206 = vsyncpa [#allocation3], 1
    %207 = vsyncpa [#allocation5], 1

</llo_original>
